<compile_context>
chip_gen: v6e
topology: v6e:2x2x1
jax: 0.10.0
libtpu: 0.0.40
codegen_flags: <defaults>
</compile_context>

<pallas_src>
import jax
import jax.numpy as jnp
from jax.experimental import pallas as pl
from jax.experimental.pallas import tpu as pltpu


# ---------------------------------------------------------------------------
# Kernel
# ---------------------------------------------------------------------------
def spectral_mul_kernel(x_ref, wr_ref, wi_ref, o_ref):
    """Complex per-mode channel mixing as ONE mode-batched real matmul.

    x_ref  : (tM, B, 2*Ci)   [xr | xi] packed along the contraction axis
    wr_ref : (tM, Ci, Co)    real part of the spectral weights
    wi_ref : (tM, Ci, Co)    imag part of the spectral weights
    o_ref  : (tM, B, 2*Co)   [out_r | out_i] packed along the lane axis
    """
    x = x_ref[...]
    wr = wr_ref[...]
    wi = wi_ref[...]

    # Real block form of the complex mixing matrix (assembled in VMEM so HBM
    # weight traffic stays at 2*Ci*Co per mode, not 4*Ci*Co):
    #   [xr | xi] @ [[ wr, wi],
    #                [-wi, wr]] = [xr wr - xi wi | xr wi + xi wr]
    w_top = jnp.concatenate([wr, wi], axis=-1)           # (tM, Ci, 2Co)
    w_bot = jnp.concatenate([-wi, wr], axis=-1)          # (tM, Ci, 2Co)
    w_blk = jnp.concatenate([w_top, w_bot], axis=-2)     # (tM, 2Ci, 2Co)

    o_ref[...] = jnp.einsum(
        'mbi,mio->mbo', x, w_blk,
        preferred_element_type=jnp.float32).astype(o_ref.dtype)


# ---------------------------------------------------------------------------
# Wrapper
# ---------------------------------------------------------------------------
def prepare_spectral_weights(wr, wi):
    """One-time relayout of PyTorch-layout weights (Ci, Co, M) -> (M, Ci, Co).

    Call once at parameter-setup time, not in every forward pass.
    """
    wr_t = jnp.transpose(wr, (2, 0, 1)).astype(jnp.float32)
    wi_t = jnp.transpose(wi, (2, 0, 1)).astype(jnp.float32)
    return wr_t, wi_t


def _round_up(v, m):
    return (v + m - 1) // m * m


def _vmem_capacity_bytes():
    try:
        info = pltpu.get_tpu_info()
        cap = getattr(info, "vmem_capacity_bytes", None)
        if cap:
            return int(cap)
    except Exception:
        pass
    return 64 << 20  # conservative default (v7x per-TensorCore VMEM)


def spectral_conv1d(x, wr_t, wi_t, modes1, *, block_modes=None):
    """Forward pass of SpectralConv1d.

    x          : (B, C_in, N) float32  (PyTorch NCL layout)
    wr_t, wi_t : (modes1, C_in, C_out) float32  from prepare_spectral_weights.
    """
    B, Ci, N = x.shape
    M, Ci_w, Co = wr_t.shape
    K = N // 2 + 1
    assert M == modes1 and Ci_w == Ci
    assert M <= K, f"modes1={M} must be <= N//2+1={K}"

    # --- FFT glue -----------------------------------------------------------
    # TODO(synk): rfft/irfft have no Pallas primitive; they remain XLA ops.
    x_ft = jnp.fft.rfft(x, axis=-1)                       # (B, Ci, K) c64
    x_low = x_ft[:, :, :M]                                # (B, Ci, M)
    # Pack [real | imag] along the (contraction) channel axis, then put modes
    # leading so the grid tiles them.  The trailing (B, 2Ci) block equals the
    # full array dims, so any mode-tile size satisfies the (8, 128) rule.
    x_pack = jnp.concatenate(
        [jnp.real(x_low), jnp.imag(x_low)], axis=1)       # (B, 2Ci, M) f32
    x_pack = jnp.transpose(x_pack, (2, 0, 1))             # (M, B, 2Ci)

    # --- VMEM budget (with (8, 128) sublane/lane padding) -------------------
    padB = _round_up(B, 8)
    per_mode_dma = 4 * (padB * _round_up(2 * Ci, 128)                 # x tile
                        + 2 * _round_up(Ci, 8) * _round_up(Co, 128)   # wr, wi
                        + padB * _round_up(2 * Co, 128))              # out tile
    per_mode_tmp = 4 * (_round_up(2 * Ci, 8) * _round_up(2 * Co, 128)     # W_blk
                        + 2 * _round_up(Ci, 8) * _round_up(2 * Co, 128)   # concats
                        + padB * _round_up(2 * Co, 128))                  # f32 acc

    vmem_cap = _vmem_capacity_bytes()
    # Scoped-VMEM cap per generation: ~40 MiB when physical VMEM is 64 MiB
    # (v7x per-TC), ~64 MiB when it is 128 MiB (v5e / v6e).
    vmem_limit_cap = (40 << 20) if vmem_cap <= (64 << 20) else (64 << 20)

    if block_modes is None:
        tile_budget = vmem_limit_cap // 2        # vmem_limit ~= 2x the need
        tM = max(1, tile_budget // (2 * per_mode_dma + per_mode_tmp))
        tM = min(tM, M)
        if M > 1:
            tM = min(tM, pl.cdiv(M, 2))          # >= 2 tiles: keep both v7x TCs busy
        while tM > 1 and M % tM != 0:            # avoid a mostly-masked last tile
            tM -= 1
    else:
        tM = int(min(block_modes, M))
    grid = (pl.cdiv(M, tM),)

    vmem_need = 2 * tM * per_mode_dma + tM * per_mode_tmp
    vmem_limit = int(min(max(2 * vmem_need + (4 << 20), 16 << 20), vmem_limit_cap))

    flops = 2 * M * B * (2 * Ci) * (2 * Co)      # one fused real matmul per mode
    bytes_accessed = 4 * M * (B * 2 * Ci + 2 * Ci * Co + B * 2 * Co)

    out_pack = pl.pallas_call(
        spectral_mul_kernel,
        grid_spec=pltpu.PrefetchScalarGridSpec(
            num_scalar_prefetch=0,
            grid=grid,
            in_specs=[
                pl.BlockSpec((tM, B, 2 * Ci), lambda m: (m, 0, 0)),
                pl.BlockSpec((tM, Ci, Co), lambda m: (m, 0, 0)),
                pl.BlockSpec((tM, Ci, Co), lambda m: (m, 0, 0)),
            ],
            out_specs=pl.BlockSpec((tM, B, 2 * Co), lambda m: (m, 0, 0)),
        ),
        out_shape=jax.ShapeDtypeStruct((M, B, 2 * Co), jnp.float32),
        compiler_params=pltpu.CompilerParams(
            dimension_semantics=(pltpu.PARALLEL,),
            vmem_limit_bytes=vmem_limit,
        ),
        cost_estimate=pl.CostEstimate(
            flops=flops, transcendentals=0, bytes_accessed=bytes_accessed),
    )(x_pack, wr_t, wi_t)

    # --- inverse FFT glue ----------------------------------------------------
    # Only the M active modes were computed; irfft(n=N) zero-extends the rest,
    # so the zero-padded out_ft is never materialized.
    out_r = out_pack[:, :, :Co]
    out_i = out_pack[:, :, Co:]
    out_ft_low = jnp.transpose(out_r + 1j * out_i, (1, 2, 0))   # (B, Co, M)
    return jnp.fft.irfft(out_ft_low, n=N, axis=-1)


# ---------------------------------------------------------------------------
# Pure-JAX reference (mirrors the PyTorch forward exactly)
# ---------------------------------------------------------------------------
def reference_spectral_conv1d(x, wr, wi, modes1):
    N = x.shape[-1]
    w = wr + 1j * wi
    x_ft = jnp.fft.rfft(x, axis=-1)
    out = jnp.einsum('bix,iox->box', x_ft[:, :, :modes1], w)
    K = N // 2 + 1
    out_ft = jnp.zeros(out.shape[:-1] + (K,), dtype=jnp.complex64)
    out_ft = out_ft.at[:, :, :modes1].set(out)
    return jnp.fft.irfft(out_ft, n=N, axis=-1)


if __name__ == "__main__":
    # Small shapes consistent with the module's forward.
    B, Cin, Cout, N, modes1 = 2, 4, 4, 16, 8   # K = N//2 + 1 = 9 >= modes1

    key = jax.random.PRNGKey(0)
    kx, kwr, kwi = jax.random.split(key, 3)

    # x: (B, C_in, N) like PyTorch NCL.
    x = jax.random.normal(kx, (B, Cin, N), dtype=jnp.float32)

    # weights1 = scale * torch.rand(Cin, Cout, modes1, dtype=cfloat):
    # real and imag parts each uniform in [0, 1), scaled by 1/(Cin*Cout).
    scale = 1.0 / (Cin * Cout)
    wr = scale * jax.random.uniform(kwr, (Cin, Cout, modes1), dtype=jnp.float32)
    wi = scale * jax.random.uniform(kwi, (Cin, Cout, modes1), dtype=jnp.float32)

    # One-time weight relayout (lives at parameter-setup time, not per call).
    wr_t, wi_t = prepare_spectral_weights(wr, wi)

    # Main check: default tiling (>= 2 mode tiles -> pipelined / 2-TC path).
    out = jax.block_until_ready(spectral_conv1d(x, wr_t, wi_t, modes1))
    ref = jax.block_until_ready(reference_spectral_conv1d(x, wr, wi, modes1))
    assert out.shape == (B, Cout, N)
    assert out.dtype == jnp.float32
    assert jnp.allclose(out, ref, atol=1e-4, rtol=1e-4)

    # Secondary check: modes1 not divisible by the tile -> masked last tile.
    modes2 = 5
    wr2, wi2 = wr[:, :, :modes2], wi[:, :, :modes2]
    wr2_t, wi2_t = prepare_spectral_weights(wr2, wi2)
    out2 = jax.block_until_ready(
        spectral_conv1d(x, wr2_t, wi2_t, modes2, block_modes=3))
    ref2 = jax.block_until_ready(reference_spectral_conv1d(x, wr2, wi2, modes2))
    assert out2.shape == (B, Cout, N)
    assert jnp.allclose(out2, ref2, atol=1e-4, rtol=1e-4)

    print("KERNEL_OK")
</pallas_src>

<mosaic_0001>
module attributes {stable_mosaic.version = 11 : i64} {
  func.func @spectral_mul_kernel(%arg0: i32, %arg1: memref<4x2x8xf32, #tpu.memory_space<vmem>>, %arg2: memref<4x4x4xf32, #tpu.memory_space<vmem>>, %arg3: memref<4x4x4xf32, #tpu.memory_space<vmem>>, %arg4: memref<4x2x8xf32, #tpu.memory_space<vmem>>) attributes {dimension_semantics = [#tpu.dimension_semantics<parallel>], iteration_bounds = array<i64: 2>, scalar_prefetch = 0 : i64, scratch_operands = 0 : i64, tpu.core_type = #tpu.core_type<tc>, window_params = [{transform_indices = @transform_0, window_bounds = array<i64: 4, 2, 8>}, {transform_indices = @transform_1, window_bounds = array<i64: 4, 4, 4>}, {transform_indices = @transform_2, window_bounds = array<i64: 4, 4, 4>}, {transform_indices = @transform_3, window_bounds = array<i64: 4, 2, 8>}]} {
    %c0 = arith.constant 0 : index
    %c0_0 = arith.constant 0 : index
    %c0_1 = arith.constant 0 : index
    %0 = vector.load %arg1[%c0, %c0_0, %c0_1] : memref<4x2x8xf32, #tpu.memory_space<vmem>>, vector<4x2x8xf32>
    %c0_2 = arith.constant 0 : index
    %c0_3 = arith.constant 0 : index
    %c0_4 = arith.constant 0 : index
    %1 = vector.load %arg2[%c0_2, %c0_3, %c0_4] : memref<4x4x4xf32, #tpu.memory_space<vmem>>, vector<4x4x4xf32>
    %c0_5 = arith.constant 0 : index
    %c0_6 = arith.constant 0 : index
    %c0_7 = arith.constant 0 : index
    %2 = vector.load %arg3[%c0_5, %c0_6, %c0_7] : memref<4x4x4xf32, #tpu.memory_space<vmem>>, vector<4x4x4xf32>
    %3 = tpu.concatenate %1, %2 in 2 : vector<4x4x4xf32>, vector<4x4x4xf32> -> vector<4x4x8xf32>
    %cst = arith.constant 0.000000e+00 : f32
    %4 = vector.broadcast %cst : f32 to vector<4x4x4xf32>
    %5 = arith.subf %4, %2 : vector<4x4x4xf32>
    %6 = tpu.concatenate %5, %1 in 2 : vector<4x4x4xf32>, vector<4x4x4xf32> -> vector<4x4x8xf32>
    %7 = tpu.concatenate %3, %6 in 1 : vector<4x4x8xf32>, vector<4x4x8xf32> -> vector<4x8x8xf32>
    "tpu.trace_start"() <{level = 10 : i32, message = "mbi,mio->mbo"}> : () -> ()
    %cst_8 = arith.constant dense<0.000000e+00> : vector<4x2x8xf32>
    %8 = tpu.matmul %0, %7, %cst_8 {dimension_numbers = #tpu.dot_dimension_numbers<[2], [1], [1], [2], [0, 0, 0, 1, 1, 2], [0], [0]>} : vector<4x2x8xf32>, vector<4x8x8xf32>, vector<4x2x8xf32> -> vector<4x2x8xf32>
    "tpu.trace_stop"() : () -> ()
    %c0_9 = arith.constant 0 : index
    %c0_10 = arith.constant 0 : index
    %c0_11 = arith.constant 0 : index
    %9 = vector.load %arg4[%c0_9, %c0_10, %c0_11] : memref<4x2x8xf32, #tpu.memory_space<vmem>>, vector<4x2x8xf32>
    tpu.vector_store %arg4[%c0_9, %c0_10, %c0_11], %8 {strides = array<i32>} : memref<4x2x8xf32, #tpu.memory_space<vmem>>, vector<4x2x8xf32>,
    return
  }
  func.func @transform_0(%arg0: i32) -> (i32, i32, i32) {
    %c0_i32 = arith.constant 0 : i32
    %c0_i32_0 = arith.constant 0 : i32
    %c0_i32_1 = arith.constant 0 : i32
    return %arg0, %c0_i32, %c0_i32_0 : i32, i32, i32
  }
  func.func @transform_1(%arg0: i32) -> (i32, i32, i32) {
    %c0_i32 = arith.constant 0 : i32
    %c0_i32_0 = arith.constant 0 : i32
    %c0_i32_1 = arith.constant 0 : i32
    return %arg0, %c0_i32, %c0_i32_0 : i32, i32, i32
  }
  func.func @transform_2(%arg0: i32) -> (i32, i32, i32) {
    %c0_i32 = arith.constant 0 : i32
    %c0_i32_0 = arith.constant 0 : i32
    %c0_i32_1 = arith.constant 0 : i32
    return %arg0, %c0_i32, %c0_i32_0 : i32, i32, i32
  }
  func.func @transform_3(%arg0: i32) -> (i32, i32, i32) {
    %c0_i32 = arith.constant 0 : i32
    %c0_i32_0 = arith.constant 0 : i32
    %c0_i32_1 = arith.constant 0 : i32
    return %arg0, %c0_i32, %c0_i32_0 : i32, i32, i32
  }
}

</mosaic_0001>

<llo_original>
// kernel: tpu_custom_call.1
$region0: #{tpu_custom_call.1}
  #allocation0 [shape = 'u32[]', space=smem, size = 0x4, offset = 0x4, fixed_abs, tag = 'smem constant byte address 0x4 - core index']
  #allocation1 [shape = 'u32[144,128]{1,0:T(1,128)}', space=vmem, size = 0x12000, scoped, tag = 'internal scratch']
  %s0 = inlined_call_operand.vmem [shape: f32[8,2,8], index: 0, kind: input, shape index: {}]
  %s1 = inlined_call_operand.vmem [shape: f32[8,4,4], index: 1, kind: input, shape index: {}]
  %s2 = inlined_call_operand.vmem [shape: f32[8,4,4], index: 2, kind: input, shape index: {}]
  %s3 = inlined_call_operand.hbm [shape: f32[8,2,8], index: 3, kind: output, shape index: {}]
  %s4 = sld [smem:[#allocation0]]
  $region45: #{tpu_custom_call.1} parent=0
    _
  %s6 = ssub.s32 1, %s4
  %s7 = scalar_select 0, %s6, %s4
  $region1: #{tpu_custom_call.1} parent=0
    #allocation2 [shape = 'u8[8192]{0}', space=vmem, size = 0x2000, scoped, tag = 'output window, operand 0']
    #allocation3 [shape = 's32[2]{0}', space=sflag, size = 0x8, scoped, tag = 'scoped memory for tpu_custom_call.1']
    %8 = vsyncpa [#allocation3], 0
    %s9 = scalar_lea.sflag [#allocation3], 1
    %10 = vsyncpa %s9, 0
    loop: start=0, step=1, limit=4
    $region2: #{tpu_custom_call.1} parent=1 // loop_pre_header
      _
    $region3: #{tpu_custom_call.1} parent=1 // loop_header
      %s12 = sphi 0, %s16
      %p13 = scmp.ge.s32.totalorder %s12, 4
      %s22 = sphi 0, %s24
      %s25 = sphi 0, %s22
      %s26 = sphi 0, %s25
      %s42 = sphi 0, %s26
      %s48 = sphi 0, %s50
      %s51 = sphi 0, %s48
      %s52 = sphi 0, %s51
      %s68 = sphi 0, %s52
      %s74 = sphi 0, %s76
      %s77 = sphi 0, %s74
      %s78 = sphi 0, %s77
      %s94 = sphi 0, %s78
      %s100 = sphi 0, %s102
      %s103 = sphi 0, %s100
      %s104 = sphi 0, %s103
      %s120 = sphi 0, %s104
    $region4: #{tpu_custom_call.1} parent=1 // loop_header_branch
      %15 = sbr.rel (%p13) target = $region8
    $region5: #{tpu_custom_call.1} parent=1 // loop_body
      %s17 = ssub.s32 %s12, 1
      %s18 = ssub.s32 %s12, 2
      %s19 = sadd.s32 %s12, 1
      %s20 = ssub.s32 %s12, %s19
      %p21 = scmp.eq.s32.totalorder %s20, 0
      %s23 = sadd.s32 %s22, 1
      %s24 = scalar_select %p21, %s22, %s23
      %p27 = pneg %p21
      %p28 = scmp.eq.s32.totalorder %s12, 1
      %p29 = por %p27, %p28
      %p30 = scmp.ne.s32.totalorder %s22, %s25
      %p31 = scmp.eq.s32.totalorder %s12, 0
      %p32 = por %p30, %p31
      %p33 = scmp.ne.s32.totalorder %s22, %s25
      %p34 = scmp.eq.s32.totalorder %s17, 1
      %p35 = por %p33, %p34
      %p36 = scmp.ne.s32.totalorder %s25, %s26
      %p37 = scmp.eq.s32.totalorder %s17, 0
      %p38 = por %p36, %p37
      %p39 = scmp.ne.s32.totalorder %s25, %s26
      %p40 = scmp.eq.s32.totalorder %s18, 1
      %p41 = por %p39, %p40
      %p43 = scmp.ne.s32.totalorder %s26, %s42
      %p44 = scmp.eq.s32.totalorder %s18, 0
      %p45 = por %p43, %p44
      %s46 = ssub.s32 %s12, %s19
      %p47 = scmp.eq.s32.totalorder %s46, 0
      %s49 = sadd.s32 %s48, 1
      %s50 = scalar_select %p47, %s48, %s49
      %p53 = pneg %p47
      %p54 = scmp.eq.s32.totalorder %s12, 1
      %p55 = por %p53, %p54
      %p56 = scmp.ne.s32.totalorder %s48, %s51
      %p57 = scmp.eq.s32.totalorder %s12, 0
      %p58 = por %p56, %p57
      %p59 = scmp.ne.s32.totalorder %s48, %s51
      %p60 = scmp.eq.s32.totalorder %s17, 1
      %p61 = por %p59, %p60
      %p62 = scmp.ne.s32.totalorder %s51, %s52
      %p63 = scmp.eq.s32.totalorder %s17, 0
      %p64 = por %p62, %p63
      %p65 = scmp.ne.s32.totalorder %s51, %s52
      %p66 = scmp.eq.s32.totalorder %s18, 1
      %p67 = por %p65, %p66
      %p69 = scmp.ne.s32.totalorder %s52, %s68
      %p70 = scmp.eq.s32.totalorder %s18, 0
      %p71 = por %p69, %p70
      %s72 = ssub.s32 %s12, %s19
      %p73 = scmp.eq.s32.totalorder %s72, 0
      %s75 = sadd.s32 %s74, 1
      %s76 = scalar_select %p73, %s74, %s75
      %p79 = pneg %p73
      %p80 = scmp.eq.s32.totalorder %s12, 1
      %p81 = por %p79, %p80
      %p82 = scmp.ne.s32.totalorder %s74, %s77
      %p83 = scmp.eq.s32.totalorder %s12, 0
      %p84 = por %p82, %p83
      %p85 = scmp.ne.s32.totalorder %s74, %s77
      %p86 = scmp.eq.s32.totalorder %s17, 1
      %p87 = por %p85, %p86
      %p88 = scmp.ne.s32.totalorder %s77, %s78
      %p89 = scmp.eq.s32.totalorder %s17, 0
      %p90 = por %p88, %p89
      %p91 = scmp.ne.s32.totalorder %s77, %s78
      %p92 = scmp.eq.s32.totalorder %s18, 1
      %p93 = por %p91, %p92
      %p95 = scmp.ne.s32.totalorder %s78, %s94
      %p96 = scmp.eq.s32.totalorder %s18, 0
      %p97 = por %p95, %p96
      %s98 = ssub.s32 %s12, %s19
      %p99 = scmp.eq.s32.totalorder %s98, 0
      %s101 = sadd.s32 %s100, 1
      %s102 = scalar_select %p99, %s100, %s101
      %p105 = pneg %p99
      %p106 = scmp.eq.s32.totalorder %s12, 1
      %p107 = por %p105, %p106
      %p108 = scmp.ne.s32.totalorder %s100, %s103
      %p109 = scmp.eq.s32.totalorder %s12, 0
      %p110 = por %p108, %p109
      %p111 = scmp.ne.s32.totalorder %s100, %s103
      %p112 = scmp.eq.s32.totalorder %s17, 1
      %p113 = por %p111, %p112
      %p114 = scmp.ne.s32.totalorder %s103, %s104
      %p115 = scmp.eq.s32.totalorder %s17, 0
      %p116 = por %p114, %p115
      %p117 = scmp.ne.s32.totalorder %s103, %s104
      %p118 = scmp.eq.s32.totalorder %s18, 1
      %p119 = por %p117, %p118
      %p121 = scmp.ne.s32.totalorder %s104, %s120
      %p122 = scmp.eq.s32.totalorder %s18, 0
      %p123 = por %p121, %p122
      %p124 = scmp.le.s32.totalorder 1, %s12
      %p125 = scmp.lt.s32.totalorder %s12, 3
      %p126 = pnand %p124, %p125
      %p127 = pneg %p126
      // Predicated region
      $region9: #{tpu_custom_call.1} parent=5 // pred_check
        _
      $region10: #{tpu_custom_call.1} parent=5 // pred_check_branch
        %129 = sbr.rel (%p126) target = $region12
      $region11: #{tpu_custom_call.1} parent=5 // pred_region
        %s130 = ssub.s32 %s12, 1
      $region12: #{tpu_custom_call.1} parent=5 // pred_fallthru
        _
      %p131 = scmp.lt.s32.totalorder %s12, 2
      // Predicated region
      $region13: #{tpu_custom_call.1} parent=5 // pred_check
        %p132 = pneg %p131
      $region14: #{tpu_custom_call.1} parent=5 // pred_check_branch
        %134 = sbr.rel (%p132) target = $region16
      $region15: #{tpu_custom_call.1} parent=5 // pred_region
        // Predicated region
        $region17: #{tpu_custom_call.1} parent=15 // pred_check
          %p135 = pneg %p32
        $region18: #{tpu_custom_call.1} parent=15 // pred_check_branch
          %137 = sbr.rel (%p135) target = $region20
        $region19: #{tpu_custom_call.1} parent=15 // pred_region
          %s138 = smul.u32 4, %s12
          %p139 = scmp.lt.s32.totalorder %s138, 7
          %s140 = scalar_select %p139, %s138, 7
          %s141 = smul.addr %s140, 2
          %s142 = scalar_lea.vmem %s0, %s141
          %s143 = smul.u32 4, %s12
        $region20: #{tpu_custom_call.1} parent=15 // pred_fallthru
          _
        // Predicated region
        $region21: #{tpu_custom_call.1} parent=15 // pred_check
          %p144 = pneg %p58
        $region22: #{tpu_custom_call.1} parent=15 // pred_check_branch
          %146 = sbr.rel (%p144) target = $region24
        $region23: #{tpu_custom_call.1} parent=15 // pred_region
          %s147 = smul.u32 4, %s12
          %p148 = scmp.lt.s32.totalorder %s147, 7
          %s149 = scalar_select %p148, %s147, 7
          %s150 = smul.addr %s149, 4
          %s151 = scalar_lea.vmem %s1, %s150
          %s152 = smul.u32 4, %s12
        $region24: #{tpu_custom_call.1} parent=15 // pred_fallthru
          _
        // Predicated region
        $region25: #{tpu_custom_call.1} parent=15 // pred_check
          %p153 = pneg %p84
        $region26: #{tpu_custom_call.1} parent=15 // pred_check_branch
          %155 = sbr.rel (%p153) target = $region28
        $region27: #{tpu_custom_call.1} parent=15 // pred_region
          %s156 = smul.u32 4, %s12
          %p157 = scmp.lt.s32.totalorder %s156, 7
          %s158 = scalar_select %p157, %s156, 7
          %s159 = smul.addr %s158, 4
          %s160 = scalar_lea.vmem %s2, %s159
          %s161 = smul.u32 4, %s12
        $region28: #{tpu_custom_call.1} parent=15 // pred_fallthru
          _
      $region16: #{tpu_custom_call.1} parent=5 // pred_fallthru
        _
      %p162 = scmp.le.s32.totalorder 1, %s12
      %p163 = scmp.lt.s32.totalorder %s12, 3
      %p164 = pnand %p162, %p163
      %p165 = pneg %p164
      // Predicated region
      $region29: #{tpu_custom_call.1} parent=5 // pred_check
        _
      $region30: #{tpu_custom_call.1} parent=5 // pred_check_branch
        %167 = sbr.rel (%p164) target = $region32
      $region31: #{tpu_custom_call.1} parent=5 // pred_region
        %s168 = ssub.s32 %s12, 1
        %s169 = smul.u32 4, %s17
        %p170 = scmp.lt.s32.totalorder %s169, 7
        %s171 = scalar_select %p170, %s169, 7
        %s172 = smul.addr %s171, 2
        %s173 = scalar_lea.vmem %s0, %s172
        %p174 = pneg %p38
        %p175 = pneg %p35
        %s176 = smul.u32 4, %s17
        %p177 = scmp.lt.s32.totalorder %s176, 7
        %s178 = scalar_select %p177, %s176, 7
        %s179 = smul.addr %s178, 4
        %s180 = scalar_lea.vmem %s1, %s179
        %p181 = pneg %p64
        %p182 = pneg %p61
        %s183 = smul.u32 4, %s17
        %p184 = scmp.lt.s32.totalorder %s183, 7
        %s185 = scalar_select %p184, %s183, 7
        %s186 = smul.addr %s185, 4
        %s187 = scalar_lea.vmem %s2, %s186
        %p188 = pneg %p90
        %p189 = pneg %p87
        %p190 = pneg %p116
        %p191 = pneg %p113
        %s192 = sand.u32 %s103, 1
        %s193 = scalar_lea.sflag [#allocation3], %s192
        %s194 = sand.u32 %s103, 1
        %s195 = smul.addr %s194, 8
        %s196 = scalar_lea.vmem [#allocation2], %s195
        %s197 = smul.u32 4, %s17
        %p198 = scmp.lt.s32.totalorder %s197, 7
        %s199 = scalar_select %p198, %s197, 7
        %s200 = smul.addr %s199, 2
        %s201 = scalar_lea.vmem %s0, %s200
        %s202 = smul.u32 4, %s17
        %s203 = smul.u32 4, %s17
        %p204 = scmp.lt.s32.totalorder %s203, 7
        %s205 = scalar_select %p204, %s203, 7
        %s206 = smul.addr %s205, 4
        %s207 = scalar_lea.vmem %s1, %s206
        %s208 = smul.u32 4, %s17
        %s209 = smul.u32 4, %s17
        %p210 = scmp.lt.s32.totalorder %s209, 7
        %s211 = scalar_select %p210, %s209, 7
        %s212 = smul.addr %s211, 4
        %s213 = scalar_lea.vmem %s2, %s212
        %s214 = smul.u32 4, %s17
        %s215 = smul.u32 4, %s17
        %v216 = vld [vmem:[%s201] sm:$0x3]
        %v217 = vld [vmem:[%s201 + $0x2] sm:$0x3]
        %v218 = vld [vmem:[%s201 + $0x4] sm:$0x3]
        %v219 = vld [vmem:[%s201 + $0x6] sm:$0x3]
        %v220 = vld [vmem:[%s207] sm:$0xf]
        %v221 = vld [vmem:[%s207 + $0x4] sm:$0xf]
        %v222 = vld [vmem:[%s207 + $0x8] sm:$0xf]
        %v223 = vld [vmem:[%s207 + $0xc] sm:$0xf]
        %v224 = vld [vmem:[%s213] sm:$0xf]
        %v225 = vld [vmem:[%s213 + $0x4] sm:$0xf]
        %v226 = vld [vmem:[%s213 + $0x8] sm:$0xf]
        %v227 = vld [vmem:[%s213 + $0xc] sm:$0xf]
        %232 = vrot.lane.b32.xlu0 %v224, 4
        %v233 = vpop.permute.xlu0 %232
        %234 = vrot.lane.b32.xlu0 %v225, 4
        %v235 = vpop.permute.xlu0 %234
        %236 = vrot.lane.b32.xlu0 %v226, 4
        %v237 = vpop.permute.xlu0 %236
        %238 = vrot.lane.b32.xlu0 %v227, 4
        %v239 = vpop.permute.xlu0 %238
        %vm244 = vcmask 31744
        %v245 = vsel %vm244, %v220, %v233
        %v246 = vsel %vm244, %v221, %v235
        %v247 = vsel %vm244, %v222, %v237
        %v248 = vsel %vm244, %v223, %v239
        %v249 = vsub.f32 0.0, %v224
        %v250 = vsub.f32 0.0, %v225
        %v251 = vsub.f32 0.0, %v226
        %v252 = vsub.f32 0.0, %v227
        %257 = vrot.lane.b32.xlu0 %v220, 4
        %v258 = vpop.permute.xlu0 %257
        %259 = vrot.lane.b32.xlu0 %v221, 4
        %v260 = vpop.permute.xlu0 %259
        %261 = vrot.lane.b32.xlu0 %v222, 4
        %v262 = vpop.permute.xlu0 %261
        %263 = vrot.lane.b32.xlu0 %v223, 4
        %v264 = vpop.permute.xlu0 %263
        %v269 = vsel %vm244, %v249, %v258
        %v270 = vsel %vm244, %v250, %v260
        %v271 = vsel %vm244, %v251, %v262
        %v272 = vsel %vm244, %v252, %v264
        %v277 = vrot.slane %v269, 4
        %v278 = vrot.slane %v270, 4
        %v279 = vrot.slane %v271, 4
        %v280 = vrot.slane %v272, 4
        %vm285 = vcmask 1043456
        %v286 = vsel %vm285, %v245, %v277
        %v287 = vsel %vm285, %v246, %v278
        %v288 = vsel %vm285, %v247, %v279
        %v289 = vsel %vm285, %v248, %v280
        %vm290 = vcmask 64512
        %v292 = vsel %vm290, %v216, 0
        %294 = vmatprep.subr.mxu0 0.0
        %295 = vmatpush1.msra.mxu0 0.0
        %296 = vmatprep.subr.mxu0 0.0
        %297 = vmatpush1.msra.mxu0 0.0
        %298 = vmatprep.subr.mxu0 0.0
        %299 = vmatpush1.msra.mxu0 0.0
        %300 = vmatprep.subr.mxu0 0.0
        %301 = vmatpush1.msra.mxu0 0.0
        %302 = vmatprep.subr.mxu0 0.0
        %303 = vmatpush1.msra.mxu0 0.0
        %304 = vmatprep.subr.mxu0 0.0
        %305 = vmatpush1.msra.mxu0 0.0
        %306 = vmatprep.subr.mxu0 0.0
        %307 = vmatpush1.msra.mxu0 0.0
        %308 = vmatprep.subr.mxu0 0.0
        %309 = vmatpush1.msra.mxu0 0.0
        %310 = vmatprep.subr.mxu0 0.0
        %311 = vmatpush1.msra.mxu0 0.0
        %312 = vmatprep.subr.mxu0 0.0
        %313 = vmatpush1.msra.mxu0 0.0
        %314 = vmatprep.subr.mxu0 0.0
        %315 = vmatpush1.msra.mxu0 0.0
        %316 = vmatprep.subr.mxu0 0.0
        %317 = vmatpush1.msra.mxu0 0.0
        %318 = vmatprep.subr.mxu0 0.0
        %319 = vmatpush1.msra.mxu0 0.0
        %320 = vmatprep.subr.mxu0 0.0
        %321 = vmatpush1.msra.mxu0 0.0
        %322 = vmatprep.subr.mxu0 0.0
        %323 = vmatpush1.msra.mxu0 0.0
        %324 = vmatprep.subr.mxu0 0.0
        %325 = vmatpush1.msra.mxu0 %v286
        %326 = vmatprep.subr.mxu0 0.0
        %327 = vmatpush2.msra.mxu0 0.0
        %328 = vmatprep.subr.mxu0 0.0
        %329 = vmatpush2.msra.mxu0 0.0
        %330 = vmatprep.subr.mxu0 0.0
        %331 = vmatpush2.msra.mxu0 0.0
        %332 = vmatprep.subr.mxu0 0.0
        %333 = vmatpush2.msra.mxu0 0.0
        %334 = vmatprep.subr.mxu0 0.0
        %335 = vmatpush2.msra.mxu0 0.0
        %336 = vmatprep.subr.mxu0 0.0
        %337 = vmatpush2.msra.mxu0 0.0
        %338 = vmatprep.subr.mxu0 0.0
        %339 = vmatpush2.msra.mxu0 0.0
        %340 = vmatprep.subr.mxu0 0.0
        %341 = vmatpush2.msra.mxu0 0.0
        %342 = vmatprep.subr.mxu0 0.0
        %343 = vmatpush2.msra.mxu0 0.0
        %344 = vmatprep.subr.mxu0 0.0
        %345 = vmatpush2.msra.mxu0 0.0
        %346 = vmatprep.subr.mxu0 0.0
        %347 = vmatpush2.msra.mxu0 0.0
        %348 = vmatprep.subr.mxu0 0.0
        %349 = vmatpush2.msra.mxu0 0.0
        %350 = vmatprep.subr.mxu0 0.0
        %351 = vmatpush2.msra.mxu0 0.0
        %352 = vmatprep.subr.mxu0 0.0
        %353 = vmatpush2.msra.mxu0 0.0
        %354 = vmatprep.subr.mxu0 0.0
        %355 = vmatpush2.msra.mxu0 0.0
        %356 = vmatprep.subr.mxu0 0.0
        %357 = vmatpush2.msra.mxu0 0.0
        %358 = vmatprep.mubr.f32.mxu0 0.0
        %359 = vmatmul.mubr.f32.gmra.mxu0 %v292
        %v360 = vpop.f32.mrf.mxu0
        %v361 = vadd.f32 0.0, %v360
        %v362 = vpop.f32.mrf.mxu0
        %363 = vdwg.mxu0
        %v365 = vsel %vm290, %v217, 0
        %367 = vmatprep.subr.mxu0 0.0
        %368 = vmatpush1.msra.mxu0 0.0
        %369 = vmatprep.subr.mxu0 0.0
        %370 = vmatpush1.msra.mxu0 0.0
        %371 = vmatprep.subr.mxu0 0.0
        %372 = vmatpush1.msra.mxu0 0.0
        %373 = vmatprep.subr.mxu0 0.0
        %374 = vmatpush1.msra.mxu0 0.0
        %375 = vmatprep.subr.mxu0 0.0
        %376 = vmatpush1.msra.mxu0 0.0
        %377 = vmatprep.subr.mxu0 0.0
        %378 = vmatpush1.msra.mxu0 0.0
        %379 = vmatprep.subr.mxu0 0.0
        %380 = vmatpush1.msra.mxu0 0.0
        %381 = vmatprep.subr.mxu0 0.0
        %382 = vmatpush1.msra.mxu0 0.0
        %383 = vmatprep.subr.mxu0 0.0
        %384 = vmatpush1.msra.mxu0 0.0
        %385 = vmatprep.subr.mxu0 0.0
        %386 = vmatpush1.msra.mxu0 0.0
        %387 = vmatprep.subr.mxu0 0.0
        %388 = vmatpush1.msra.mxu0 0.0
        %389 = vmatprep.subr.mxu0 0.0
        %390 = vmatpush1.msra.mxu0 0.0
        %391 = vmatprep.subr.mxu0 0.0
        %392 = vmatpush1.msra.mxu0 0.0
        %393 = vmatprep.subr.mxu0 0.0
        %394 = vmatpush1.msra.mxu0 0.0
        %395 = vmatprep.subr.mxu0 0.0
        %396 = vmatpush1.msra.mxu0 0.0
        %397 = vmatprep.subr.mxu0 0.0
        %398 = vmatpush1.msra.mxu0 %v287
        %399 = vmatprep.subr.mxu0 0.0
        %400 = vmatpush2.msra.mxu0 0.0
        %401 = vmatprep.subr.mxu0 0.0
        %402 = vmatpush2.msra.mxu0 0.0
        %403 = vmatprep.subr.mxu0 0.0
        %404 = vmatpush2.msra.mxu0 0.0
        %405 = vmatprep.subr.mxu0 0.0
        %406 = vmatpush2.msra.mxu0 0.0
        %407 = vmatprep.subr.mxu0 0.0
        %408 = vmatpush2.msra.mxu0 0.0
        %409 = vmatprep.subr.mxu0 0.0
        %410 = vmatpush2.msra.mxu0 0.0
        %411 = vmatprep.subr.mxu0 0.0
        %412 = vmatpush2.msra.mxu0 0.0
        %413 = vmatprep.subr.mxu0 0.0
        %414 = vmatpush2.msra.mxu0 0.0
        %415 = vmatprep.subr.mxu0 0.0
        %416 = vmatpush2.msra.mxu0 0.0
        %417 = vmatprep.subr.mxu0 0.0
        %418 = vmatpush2.msra.mxu0 0.0
        %419 = vmatprep.subr.mxu0 0.0
        %420 = vmatpush2.msra.mxu0 0.0
        %421 = vmatprep.subr.mxu0 0.0
        %422 = vmatpush2.msra.mxu0 0.0
        %423 = vmatprep.subr.mxu0 0.0
        %424 = vmatpush2.msra.mxu0 0.0
        %425 = vmatprep.subr.mxu0 0.0
        %426 = vmatpush2.msra.mxu0 0.0
        %427 = vmatprep.subr.mxu0 0.0
        %428 = vmatpush2.msra.mxu0 0.0
        %429 = vmatprep.subr.mxu0 0.0
        %430 = vmatpush2.msra.mxu0 0.0
        %431 = vmatprep.mubr.f32.mxu0 0.0
        %432 = vmatmul.mubr.f32.gmra.mxu0 %v365
        %v433 = vpop.f32.mrf.mxu0
        %v434 = vadd.f32 0.0, %v433
        %v435 = vpop.f32.mrf.mxu0
        %436 = vdwg.mxu0
        %v438 = vsel %vm290, %v218, 0
        %440 = vmatprep.subr.mxu0 0.0
        %441 = vmatpush1.msra.mxu0 0.0
        %442 = vmatprep.subr.mxu0 0.0
        %443 = vmatpush1.msra.mxu0 0.0
        %444 = vmatprep.subr.mxu0 0.0
        %445 = vmatpush1.msra.mxu0 0.0
        %446 = vmatprep.subr.mxu0 0.0
        %447 = vmatpush1.msra.mxu0 0.0
        %448 = vmatprep.subr.mxu0 0.0
        %449 = vmatpush1.msra.mxu0 0.0
        %450 = vmatprep.subr.mxu0 0.0
        %451 = vmatpush1.msra.mxu0 0.0
        %452 = vmatprep.subr.mxu0 0.0
        %453 = vmatpush1.msra.mxu0 0.0
        %454 = vmatprep.subr.mxu0 0.0
        %455 = vmatpush1.msra.mxu0 0.0
        %456 = vmatprep.subr.mxu0 0.0
        %457 = vmatpush1.msra.mxu0 0.0
        %458 = vmatprep.subr.mxu0 0.0
        %459 = vmatpush1.msra.mxu0 0.0
        %460 = vmatprep.subr.mxu0 0.0
        %461 = vmatpush1.msra.mxu0 0.0
        %462 = vmatprep.subr.mxu0 0.0
        %463 = vmatpush1.msra.mxu0 0.0
        %464 = vmatprep.subr.mxu0 0.0
        %465 = vmatpush1.msra.mxu0 0.0
        %466 = vmatprep.subr.mxu0 0.0
        %467 = vmatpush1.msra.mxu0 0.0
        %468 = vmatprep.subr.mxu0 0.0
        %469 = vmatpush1.msra.mxu0 0.0
        %470 = vmatprep.subr.mxu0 0.0
        %471 = vmatpush1.msra.mxu0 %v288
        %472 = vmatprep.subr.mxu0 0.0
        %473 = vmatpush2.msra.mxu0 0.0
        %474 = vmatprep.subr.mxu0 0.0
        %475 = vmatpush2.msra.mxu0 0.0
        %476 = vmatprep.subr.mxu0 0.0
        %477 = vmatpush2.msra.mxu0 0.0
        %478 = vmatprep.subr.mxu0 0.0
        %479 = vmatpush2.msra.mxu0 0.0
        %480 = vmatprep.subr.mxu0 0.0
        %481 = vmatpush2.msra.mxu0 0.0
        %482 = vmatprep.subr.mxu0 0.0
        %483 = vmatpush2.msra.mxu0 0.0
        %484 = vmatprep.subr.mxu0 0.0
        %485 = vmatpush2.msra.mxu0 0.0
        %486 = vmatprep.subr.mxu0 0.0
        %487 = vmatpush2.msra.mxu0 0.0
        %488 = vmatprep.subr.mxu0 0.0
        %489 = vmatpush2.msra.mxu0 0.0
        %490 = vmatprep.subr.mxu0 0.0
        %491 = vmatpush2.msra.mxu0 0.0
        %492 = vmatprep.subr.mxu0 0.0
        %493 = vmatpush2.msra.mxu0 0.0
        %494 = vmatprep.subr.mxu0 0.0
        %495 = vmatpush2.msra.mxu0 0.0
        %496 = vmatprep.subr.mxu0 0.0
        %497 = vmatpush2.msra.mxu0 0.0
        %498 = vmatprep.subr.mxu0 0.0
        %499 = vmatpush2.msra.mxu0 0.0
        %500 = vmatprep.subr.mxu0 0.0
        %501 = vmatpush2.msra.mxu0 0.0
        %502 = vmatprep.subr.mxu0 0.0
        %503 = vmatpush2.msra.mxu0 0.0
        %504 = vmatprep.mubr.f32.mxu0 0.0
        %505 = vmatmul.mubr.f32.gmra.mxu0 %v438
        %v506 = vpop.f32.mrf.mxu0
        %v507 = vadd.f32 0.0, %v506
        %v508 = vpop.f32.mrf.mxu0
        %509 = vdwg.mxu0
        %v511 = vsel %vm290, %v219, 0
        %513 = vmatprep.subr.mxu0 0.0
        %514 = vmatpush1.msra.mxu0 0.0
        %515 = vmatprep.subr.mxu0 0.0
        %516 = vmatpush1.msra.mxu0 0.0
        %517 = vmatprep.subr.mxu0 0.0
        %518 = vmatpush1.msra.mxu0 0.0
        %519 = vmatprep.subr.mxu0 0.0
        %520 = vmatpush1.msra.mxu0 0.0
        %521 = vmatprep.subr.mxu0 0.0
        %522 = vmatpush1.msra.mxu0 0.0
        %523 = vmatprep.subr.mxu0 0.0
        %524 = vmatpush1.msra.mxu0 0.0
        %525 = vmatprep.subr.mxu0 0.0
        %526 = vmatpush1.msra.mxu0 0.0
        %527 = vmatprep.subr.mxu0 0.0
        %528 = vmatpush1.msra.mxu0 0.0
        %529 = vmatprep.subr.mxu0 0.0
        %530 = vmatpush1.msra.mxu0 0.0
        %531 = vmatprep.subr.mxu0 0.0
        %532 = vmatpush1.msra.mxu0 0.0
        %533 = vmatprep.subr.mxu0 0.0
        %534 = vmatpush1.msra.mxu0 0.0
        %535 = vmatprep.subr.mxu0 0.0
        %536 = vmatpush1.msra.mxu0 0.0
        %537 = vmatprep.subr.mxu0 0.0
        %538 = vmatpush1.msra.mxu0 0.0
        %539 = vmatprep.subr.mxu0 0.0
        %540 = vmatpush1.msra.mxu0 0.0
        %541 = vmatprep.subr.mxu0 0.0
        %542 = vmatpush1.msra.mxu0 0.0
        %543 = vmatprep.subr.mxu0 0.0
        %544 = vmatpush1.msra.mxu0 %v289
        %545 = vmatprep.subr.mxu0 0.0
        %546 = vmatpush2.msra.mxu0 0.0
        %547 = vmatprep.subr.mxu0 0.0
        %548 = vmatpush2.msra.mxu0 0.0
        %549 = vmatprep.subr.mxu0 0.0
        %550 = vmatpush2.msra.mxu0 0.0
        %551 = vmatprep.subr.mxu0 0.0
        %552 = vmatpush2.msra.mxu0 0.0
        %553 = vmatprep.subr.mxu0 0.0
        %554 = vmatpush2.msra.mxu0 0.0
        %555 = vmatprep.subr.mxu0 0.0
        %556 = vmatpush2.msra.mxu0 0.0
        %557 = vmatprep.subr.mxu0 0.0
        %558 = vmatpush2.msra.mxu0 0.0
        %559 = vmatprep.subr.mxu0 0.0
        %560 = vmatpush2.msra.mxu0 0.0
        %561 = vmatprep.subr.mxu0 0.0
        %562 = vmatpush2.msra.mxu0 0.0
        %563 = vmatprep.subr.mxu0 0.0
        %564 = vmatpush2.msra.mxu0 0.0
        %565 = vmatprep.subr.mxu0 0.0
        %566 = vmatpush2.msra.mxu0 0.0
        %567 = vmatprep.subr.mxu0 0.0
        %568 = vmatpush2.msra.mxu0 0.0
        %569 = vmatprep.subr.mxu0 0.0
        %570 = vmatpush2.msra.mxu0 0.0
        %571 = vmatprep.subr.mxu0 0.0
        %572 = vmatpush2.msra.mxu0 0.0
        %573 = vmatprep.subr.mxu0 0.0
        %574 = vmatpush2.msra.mxu0 0.0
        %575 = vmatprep.subr.mxu0 0.0
        %576 = vmatpush2.msra.mxu0 0.0
        %577 = vmatprep.mubr.f32.mxu0 0.0
        %578 = vmatmul.mubr.f32.gmra.mxu0 %v511
        %v579 = vpop.f32.mrf.mxu0
        %v580 = vadd.f32 0.0, %v579
        %v581 = vpop.f32.mrf.mxu0
        %582 = vdwg.mxu0
        %vm583 = vcmask 58368
        %584 = vst.msk [vmem:[%s196] sm:$0x3] %vm583, %v361
        %585 = vst.msk [vmem:[%s196 + $0x2] sm:$0x3] %vm583, %v434
        %586 = vst.msk [vmem:[%s196 + $0x4] sm:$0x3] %vm583, %v507
        %587 = vst.msk [vmem:[%s196 + $0x6] sm:$0x3] %vm583, %v580
        %s588 = sand.u32 %s103, 1
        %s589 = scalar_lea.sflag [#allocation3], %s588
        %s590 = sand.u32 %s103, 1
        %s591 = smul.addr %s590, 8
        %s592 = scalar_lea.vmem [#allocation2], %s591
        // Predicated region
        $region33: #{tpu_custom_call.1} parent=31 // pred_check
          %p593 = pneg %p113
        $region34: #{tpu_custom_call.1} parent=31 // pred_check_branch
          %595 = sbr.rel (%p593) target = $region36
        $region35: #{tpu_custom_call.1} parent=31 // pred_region
          %s596 = smul.u32 4, %s17
          %s598 = ssub.s32 128, 128
          %599 = vsyncadd %s589, %s598
          %s600 = smul.addr %s596, 32
          %s601 = scalar_lea.hbm %s3, %s600
          %s602 = sshll.u32 %s592, 4
          %s603 = int_to_ptr.vmem [resolvable:$true] %s602
          %608 = dma.vmem_to_hbm [thread:$0]  %s603, 128, %s601, %s589, 32, 32, 2
        $region36: #{tpu_custom_call.1} parent=31 // pred_fallthru
          _
      $region32: #{tpu_custom_call.1} parent=5 // pred_fallthru
        _
      %p609 = scmp.le.s32.totalorder 2, %s12
      // Predicated region
      $region37: #{tpu_custom_call.1} parent=5 // pred_check
        %p610 = pneg %p609
      $region38: #{tpu_custom_call.1} parent=5 // pred_check_branch
        %612 = sbr.rel (%p610) target = $region40
      $region39: #{tpu_custom_call.1} parent=5 // pred_region
        %s613 = ssub.s32 %s12, 2
        // Predicated region
        $region41: #{tpu_custom_call.1} parent=39 // pred_check
          %p614 = pneg %p119
        $region42: #{tpu_custom_call.1} parent=39 // pred_check_branch
          %616 = sbr.rel (%p614) target = $region44
        $region43: #{tpu_custom_call.1} parent=39 // pred_region
          %s617 = sand.u32 %s104, 1
          %s618 = scalar_lea.sflag [#allocation3], %s617
          %s619 = sand.u32 %s104, 1
          %s620 = smul.addr %s619, 8
          %s621 = scalar_lea.vmem [#allocation2], %s620
          %622 = dma.done %s618, 128
        $region44: #{tpu_custom_call.1} parent=39 // pred_fallthru
          _
      $region40: #{tpu_custom_call.1} parent=5 // pred_fallthru
        _
    $region6: #{tpu_custom_call.1} parent=1 // loop_footer
      %s16 = sadd.s32 1, %s12
    $region7: #{tpu_custom_call.1} parent=1 // loop_footer_branch
      %11 = sbr.rel target = $region3
    $region8: #{tpu_custom_call.1} parent=1 // loop_exit
      _
    %623 = vsyncpa [#allocation3], 1
    %s624 = scalar_lea.sflag [#allocation3], 1
    %625 = vsyncpa %s624, 1

</llo_original>
